<compile_context>
chip_gen: v6e
topology: v6e:2x2x1
jax: 0.10.0
libtpu: 0.0.40
codegen_flags: <defaults>
</compile_context>

<pallas_src>
import functools

import jax
import jax.numpy as jnp
from jax.experimental import pallas as pl
from jax.experimental.pallas import tpu as pltpu


def _mmr_loss_kernel(x_ref, drow_ref, dcol_ref, out_ref, *,
                     margin, lamda1, fix_norm, n, tm):
    """Row-tiled max-margin ranking loss.

    x_ref    : (tm, n) tile of the similarity matrix (caller dtype)
    drow_ref : (tm, 1) f32 slice of diag(x) matching this row tile
    dcol_ref : (1, n)  f32 full diag(x) (resident, constant index map)
    out_ref  : (1, 1)  f32 accumulator / final loss (resident output block)
    """
    i = pl.program_id(0)

    @pl.when(i == 0)
    def _init():
        out_ref[...] = jnp.zeros_like(out_ref)

    x = x_ref[...].astype(jnp.float32)        # (tm, n)
    d_i = drow_ref[...]                        # (tm, 1) f32
    d_j = dcol_ref[...]                        # (1, n)  f32

    # term1[i,j] = relu(margin - d_i + x[i,j])
    # term2[i,j] = relu(margin - d_j + lamda1 * x[i,j])   (index-swapped form)
    t1 = jnp.maximum(margin - d_i + x, 0.0)
    t2 = jnp.maximum(margin - d_j + lamda1 * x, 0.0)
    s = t1 + t2

    if n % tm != 0:
        # Mask padded tail rows of the last tile out of the sum.
        gr = jax.lax.broadcasted_iota(jnp.int32, s.shape, 0) + i * tm
        s = jnp.where(gr < n, s, 0.0)

    out_ref[...] = out_ref[...] + jnp.sum(s)

    @pl.when(i == pl.num_programs(0) - 1)
    def _finalize():
        total = out_ref[...]                   # (1, 1)
        if fix_norm:
            # Analytic removal of the diagonal entries of both terms.
            diag_t2 = jnp.sum(jnp.maximum(margin + (lamda1 - 1.0) * d_j, 0.0))
            total = total - (float(n) * max(margin, 0.0) + diag_t2)
            denom = float(2 * n * (n - 1))
        else:
            denom = float(2 * n * n)
        out_ref[...] = total * (1.0 / denom)


def _pick_row_tile(n, itemsize, budget_bytes=6 * 1024 * 1024):
    """Largest row tile whose double-buffered x slab stays well under the
    default scoped VMEM limit on all generations (v5e/v6e/v7x)."""
    if n * n * itemsize <= budget_bytes:
        return n                                # single full block
    sub = {4: 8, 2: 16, 1: 32}.get(itemsize, 8)  # sublane multiple per dtype
    tm = budget_bytes // (n * itemsize)
    tm = max(sub, (tm // sub) * sub)
    return min(tm, n)


def max_margin_ranking_loss(x, margin=1.0, fix_norm=True, lamda1=1.0,
                            row_tile=None):
    n = x.shape[0]
    assert x.shape == (n, n), "expected a square similarity matrix"

    itemsize = jnp.dtype(x.dtype).itemsize
    tm = row_tile if row_tile is not None else _pick_row_tile(n, itemsize)
    assert tm == n or tm % 8 == 0, "row tile must be a sublane multiple or n"

    # Tiny side inputs: diag(x) as a column (row-sliced) and as a row (resident).
    diag = jnp.diagonal(x).astype(jnp.float32)
    d_row = diag.reshape(n, 1)
    d_col = diag.reshape(1, n)

    kernel = functools.partial(
        _mmr_loss_kernel,
        margin=float(margin),
        lamda1=float(lamda1),
        fix_norm=bool(fix_norm),
        n=n,
        tm=tm,
    )

    # NOTE: a per-tile-partials variant with dimension_semantics=("parallel",)
    # would let v7x's two TensorCores split the row axis; the accumulator
    # design below keeps the reduction axis "arbitrary" (single writeback).
    out = pl.pallas_call(
        kernel,
        out_shape=jax.ShapeDtypeStruct((1, 1), jnp.float32),
        grid=(pl.cdiv(n, tm),),
        in_specs=[
            pl.BlockSpec((tm, n), lambda i: (i, 0)),   # x row tile (caller dtype)
            pl.BlockSpec((tm, 1), lambda i: (i, 0)),   # diag rows for this tile
            pl.BlockSpec((1, n), lambda i: (0, 0)),    # full diag, resident
        ],
        out_specs=pl.BlockSpec((1, 1), lambda i: (0, 0)),
        compiler_params=pltpu.CompilerParams(
            dimension_semantics=("arbitrary",),
            vmem_limit_bytes=32 * 1024 * 1024,
        ),
    )(x, d_row, d_col)
    return out[0, 0]


def _reference_loss(x, margin=1.0, fix_norm=True, lamda1=1.0):
    """Pure-JAX reference mirroring the PyTorch forward exactly."""
    n = x.shape[0]
    x = x.astype(jnp.float32)
    d = jnp.diag(x)[:, None]
    x1 = jnp.broadcast_to(d, (n, n)).reshape(-1)
    x1 = jnp.concatenate([x1, x1], axis=0)
    x2 = jnp.concatenate([x.reshape(-1), lamda1 * x.T.reshape(-1)], axis=0)
    mm = jnp.maximum(margin - (x1 - x2), 0.0)
    if fix_norm:
        keep = (1.0 - jnp.eye(n)).reshape(-1)
        keep = jnp.concatenate([keep, keep], axis=0)
        return jnp.sum(mm * keep) / jnp.sum(keep)
    return jnp.mean(mm)


if __name__ == "__main__":
    key = jax.random.PRNGKey(0)

    # Case 1: batch of 8 pairs -> (8, 8) f32 similarity matrix (single tile).
    n = 8
    x = jax.random.normal(key, (n, n), dtype=jnp.float32)
    loss = jax.block_until_ready(
        max_margin_ranking_loss(x, margin=1.0, fix_norm=True, lamda1=1.0))
    ref = _reference_loss(x, 1.0, True, 1.0)
    assert jnp.allclose(loss, ref, atol=1e-5, rtol=1e-5), (loss, ref)

    # Case 2: (40, 40) with a forced 16-row tile -> 3-step grid with a masked
    # tail; check both fix_norm branches and non-default margin / lamda1.
    n2 = 40
    x2 = jax.random.normal(jax.random.PRNGKey(1), (n2, n2), dtype=jnp.float32)
    for fn in (True, False):
        l2 = jax.block_until_ready(
            max_margin_ranking_loss(x2, margin=0.2, fix_norm=fn, lamda1=0.5,
                                    row_tile=16))
        r2 = _reference_loss(x2, 0.2, fn, 0.5)
        assert jnp.allclose(l2, r2, atol=1e-5, rtol=1e-5), (fn, l2, r2)

    # Case 3: bf16 input streamed as-is (no wrapper cast), cast in VMEM.
    x3 = x.astype(jnp.bfloat16)
    l3 = jax.block_until_ready(max_margin_ranking_loss(x3))
    r3 = _reference_loss(x3.astype(jnp.float32))
    assert jnp.allclose(l3, r3, atol=1e-3, rtol=1e-3), (l3, r3)

    print("KERNEL_OK")
</pallas_src>

<mosaic_0001>
module attributes {stable_mosaic.version = 11 : i64} {
  func.func @_mmr_loss_kernel(%arg0: i32, %arg1: memref<8x8xf32, #tpu.memory_space<vmem>>, %arg2: memref<8x1xf32, #tpu.memory_space<vmem>>, %arg3: memref<1x8xf32, #tpu.memory_space<vmem>>, %arg4: memref<1x1xf32, #tpu.memory_space<vmem>>) attributes {dimension_semantics = [#tpu.dimension_semantics<arbitrary>], iteration_bounds = array<i64: 1>, scalar_prefetch = 0 : i64, scratch_operands = 0 : i64, tpu.core_type = #tpu.core_type<tc>, window_params = [{transform_indices = @transform_0, window_bounds = array<i64: 8, 8>}, {transform_indices = @transform_1, window_bounds = array<i64: 8, 1>}, {pipeline_mode = #tpu.pipeline_mode<synchronous>, transform_indices = @transform_2, window_bounds = array<i64: 1, 8>}, {pipeline_mode = #tpu.pipeline_mode<synchronous>, transform_indices = @transform_3, window_bounds = array<i64: 1, 1>}]} {
    %c0_i32 = arith.constant 0 : i32
    %0 = arith.cmpi eq, %arg0, %c0_i32 : i32
    %1 = arith.extui %0 : i1 to i32
    %c0_i32_0 = arith.constant 0 : i32
    %2 = arith.cmpi ne, %1, %c0_i32_0 : i32
    scf.if %2 {
      %cst_17 = arith.constant 0.000000e+00 : f32
      %32 = vector.broadcast %cst_17 : f32 to vector<1x1xf32>
      %c0_18 = arith.constant 0 : index
      %c0_19 = arith.constant 0 : index
      %33 = vector.load %arg4[%c0_18, %c0_19] : memref<1x1xf32, #tpu.memory_space<vmem>>, vector<1x1xf32>
      tpu.vector_store %arg4[%c0_18, %c0_19], %32 {strides = array<i32>} : memref<1x1xf32, #tpu.memory_space<vmem>>, vector<1x1xf32>,
    } else {
    }
    %c0 = arith.constant 0 : index
    %c0_1 = arith.constant 0 : index
    %3 = vector.load %arg1[%c0, %c0_1] : memref<8x8xf32, #tpu.memory_space<vmem>>, vector<8x8xf32>
    %c0_2 = arith.constant 0 : index
    %c0_3 = arith.constant 0 : index
    %4 = vector.load %arg2[%c0_2, %c0_3] : memref<8x1xf32, #tpu.memory_space<vmem>>, vector<8x1xf32>
    %c0_4 = arith.constant 0 : index
    %c0_5 = arith.constant 0 : index
    %5 = vector.load %arg3[%c0_4, %c0_5] : memref<1x8xf32, #tpu.memory_space<vmem>>, vector<1x8xf32>
    %cst = arith.constant 1.000000e+00 : f32
    %6 = vector.broadcast %cst : f32 to vector<8x1xf32>
    %7 = arith.subf %6, %4 : vector<8x1xf32>
    %8 = vector.broadcast %7 : vector<8x1xf32> to vector<8x8xf32>
    %9 = arith.addf %8, %3 : vector<8x8xf32>
    %cst_6 = arith.constant 0.000000e+00 : f32
    %10 = vector.broadcast %cst_6 : f32 to vector<8x8xf32>
    %11 = arith.maximumf %9, %10 : vector<8x8xf32>
    %cst_7 = arith.constant 1.000000e+00 : f32
    %12 = vector.broadcast %cst_7 : f32 to vector<1x8xf32>
    %13 = arith.subf %12, %5 : vector<1x8xf32>
    %cst_8 = arith.constant 1.000000e+00 : f32
    %14 = vector.broadcast %cst_8 : f32 to vector<8x8xf32>
    %15 = arith.mulf %14, %3 : vector<8x8xf32>
    %16 = vector.broadcast %13 : vector<1x8xf32> to vector<8x8xf32>
    %17 = arith.addf %16, %15 : vector<8x8xf32>
    %cst_9 = arith.constant 0.000000e+00 : f32
    %18 = vector.broadcast %cst_9 : f32 to vector<8x8xf32>
    %19 = arith.maximumf %17, %18 : vector<8x8xf32>
    %20 = arith.addf %11, %19 : vector<8x8xf32>
    %c0_10 = arith.constant 0 : index
    %c0_11 = arith.constant 0 : index
    %21 = vector.load %arg4[%c0_10, %c0_11] : memref<1x1xf32, #tpu.memory_space<vmem>>, vector<1x1xf32>
    %22 = vector.shape_cast %20 : vector<8x8xf32> to vector<1x8x8xf32>
    %cst_12 = arith.constant dense<0.000000e+00> : vector<1xf32>
    %23 = vector.multi_reduction <add>, %22, %cst_12 [1, 2] : vector<1x8x8xf32> to vector<1xf32>
    %24 = vector.shape_cast %23 : vector<1xf32> to vector<1x1x1xf32>
    %25 = vector.extract %24[0, 0, 0] : f32 from vector<1x1x1xf32>
    %26 = vector.broadcast %25 : f32 to vector<1x1xf32>
    %27 = arith.addf %21, %26 : vector<1x1xf32>
    %c0_13 = arith.constant 0 : index
    %c0_14 = arith.constant 0 : index
    %28 = vector.load %arg4[%c0_13, %c0_14] : memref<1x1xf32, #tpu.memory_space<vmem>>, vector<1x1xf32>
    tpu.vector_store %arg4[%c0_13, %c0_14], %27 {strides = array<i32>} : memref<1x1xf32, #tpu.memory_space<vmem>>, vector<1x1xf32>,
    %c0_i32_15 = arith.constant 0 : i32
    %29 = arith.cmpi eq, %arg0, %c0_i32_15 : i32
    %30 = arith.extui %29 : i1 to i32
    %c0_i32_16 = arith.constant 0 : i32
    %31 = arith.cmpi ne, %30, %c0_i32_16 : i32
    scf.if %31 {
      %c0_17 = arith.constant 0 : index
      %c0_18 = arith.constant 0 : index
      %32 = vector.load %arg4[%c0_17, %c0_18] : memref<1x1xf32, #tpu.memory_space<vmem>>, vector<1x1xf32>
      %cst_19 = arith.constant 0.000000e+00 : f32
      %33 = vector.broadcast %cst_19 : f32 to vector<1x8xf32>
      %34 = arith.mulf %33, %5 : vector<1x8xf32>
      %cst_20 = arith.constant 1.000000e+00 : f32
      %35 = vector.broadcast %cst_20 : f32 to vector<1x8xf32>
      %36 = arith.addf %35, %34 : vector<1x8xf32>
      %cst_21 = arith.constant 0.000000e+00 : f32
      %37 = vector.broadcast %cst_21 : f32 to vector<1x8xf32>
      %38 = arith.maximumf %36, %37 : vector<1x8xf32>
      %39 = vector.shape_cast %38 : vector<1x8xf32> to vector<1x1x8xf32>
      %cst_22 = arith.constant dense<0.000000e+00> : vector<1xf32>
      %40 = vector.multi_reduction <add>, %39, %cst_22 [1, 2] : vector<1x1x8xf32> to vector<1xf32>
      %41 = vector.shape_cast %40 : vector<1xf32> to vector<1x1x1xf32>
      %42 = vector.extract %41[0, 0, 0] : f32 from vector<1x1x1xf32>
      %cst_23 = arith.constant 8.000000e+00 : f32
      %43 = arith.addf %cst_23, %42 : f32
      %44 = vector.broadcast %43 : f32 to vector<1x1xf32>
      %45 = arith.subf %32, %44 : vector<1x1xf32>
      %cst_24 = arith.constant 0.00892857183 : f32
      %46 = vector.broadcast %cst_24 : f32 to vector<1x1xf32>
      %47 = arith.mulf %45, %46 : vector<1x1xf32>
      %c0_25 = arith.constant 0 : index
      %c0_26 = arith.constant 0 : index
      %48 = vector.load %arg4[%c0_25, %c0_26] : memref<1x1xf32, #tpu.memory_space<vmem>>, vector<1x1xf32>
      tpu.vector_store %arg4[%c0_25, %c0_26], %47 {strides = array<i32>} : memref<1x1xf32, #tpu.memory_space<vmem>>, vector<1x1xf32>,
    } else {
    }
    return
  }
  func.func @transform_0(%arg0: i32) -> (i32, i32) {
    %c0_i32 = arith.constant 0 : i32
    %c0_i32_0 = arith.constant 0 : i32
    return %arg0, %c0_i32 : i32, i32
  }
  func.func @transform_1(%arg0: i32) -> (i32, i32) {
    %c0_i32 = arith.constant 0 : i32
    %c0_i32_0 = arith.constant 0 : i32
    return %arg0, %c0_i32 : i32, i32
  }
  func.func @transform_2(%arg0: i32) -> (i32, i32) {
    %c0_i32 = arith.constant 0 : i32
    %c0_i32_0 = arith.constant 0 : i32
    %c0_i32_1 = arith.constant 0 : i32
    return %c0_i32, %c0_i32_0 : i32, i32
  }
  func.func @transform_3(%arg0: i32) -> (i32, i32) {
    %c0_i32 = arith.constant 0 : i32
    %c0_i32_0 = arith.constant 0 : i32
    %c0_i32_1 = arith.constant 0 : i32
    return %c0_i32, %c0_i32_0 : i32, i32
  }
}

</mosaic_0001>

<llo_original>
// kernel: tpu_custom_call.1
$region0: #{tpu_custom_call.1}
  #allocation0 [shape = 'u32[]', space=smem, size = 0x4, offset = 0x4, fixed_abs, tag = 'smem constant byte address 0x4 - core index']
  #allocation1 [shape = 'u32[144,128]{1,0:T(1,128)}', space=vmem, size = 0x12000, scoped, tag = 'internal scratch']
  %s0 = inlined_call_operand.vmem [shape: f32[8,8], index: 0, kind: input, shape index: {}]
  %s1 = inlined_call_operand.vmem [shape: f32[8,1], index: 1, kind: input, shape index: {}]
  %s2 = inlined_call_operand.vmem [shape: f32[1,8], index: 2, kind: input, shape index: {}]
  %s3 = inlined_call_operand.hbm [shape: f32[1,1], index: 3, kind: output, shape index: {}]
  %s4 = sld [smem:[#allocation0]]
  $region30: #{tpu_custom_call.1} parent=0
    _
  %s6 = ssub.s32 1, %s4
  %s7 = scalar_select 0, %s6, %s4
  $region1: #{tpu_custom_call.1} parent=0
    #allocation2 [shape = 'u8[512]{0}', space=vmem, size = 0x400, scoped, tag = 'output window, operand 0, single buffered']
    #allocation3 [shape = 's32[1]{0}', space=sflag, size = 0x4, scoped, tag = 'scoped memory for tpu_custom_call.1']
    %8 = vsyncpa [#allocation3], 0
    // Predicated region
    $region2: #{tpu_custom_call.1} parent=1 // pred_check
      _
    $region3: #{tpu_custom_call.1} parent=1 // pred_check_branch
      %10 = sbr.rel (0) target = $region5
    $region4: #{tpu_custom_call.1} parent=1 // pred_region
      _
    $region5: #{tpu_custom_call.1} parent=1 // pred_fallthru
      _
    // Predicated region
    $region6: #{tpu_custom_call.1} parent=1 // pred_check
      _
    $region7: #{tpu_custom_call.1} parent=1 // pred_check_branch
      %12 = sbr.rel (0) target = $region9
    $region8: #{tpu_custom_call.1} parent=1 // pred_region
      _
    $region9: #{tpu_custom_call.1} parent=1 // pred_fallthru
      _
    // Predicated region
    $region10: #{tpu_custom_call.1} parent=1 // pred_check
      _
    $region11: #{tpu_custom_call.1} parent=1 // pred_check_branch
      %14 = sbr.rel (0) target = $region13
    $region12: #{tpu_custom_call.1} parent=1 // pred_region
      _
    $region13: #{tpu_custom_call.1} parent=1 // pred_fallthru
      _
    %p15 = scmp.eq.s32.totalorder 0, 0
    // Predicated region
    $region14: #{tpu_custom_call.1} parent=1 // pred_check
      %p16 = pneg %p15
    $region15: #{tpu_custom_call.1} parent=1 // pred_check_branch
      %18 = sbr.rel (%p16) target = $region17
    $region16: #{tpu_custom_call.1} parent=1 // pred_region
      %vm19 = vcmask 0
      %20 = vst.msk [vmem:[#allocation2] sm:$0x1] %vm19, 0.0
    $region17: #{tpu_custom_call.1} parent=1 // pred_fallthru
      _
    %v21 = vld [vmem:[%s0] sm:$0xff]
    %v22 = vld [vmem:[%s1] sm:$0xff]
    %v23 = vld [vmem:[%s2] sm:$0x1]
    %v24 = vsub.f32 1.0, %v22
    %26 = vset.pattern.permute.xlu0 0
    %27 = vperm.xlu0 %26, %v24
    %v28 = vpop.permute.xlu0 %27
    %v30 = vadd.f32 %v28, %v21
    %v31 = vmax.f32 %v30, 0.0
    %v32 = vsub.f32 1.0, %v23
    %v34 = vlaneseq
    %v35 = vshrl.u32 %v34, 7
    %v36 = vsub.s32 0, %v35
    %v37 = vrot.slane %v32, %v36
    %v39 = vadd.f32 %v37, %v21
    %v40 = vmax.f32 %v39, 0.0
    %v41 = vadd.f32 %v31, %v40
    %v42 = vld [vmem:[#allocation2] sm:$0x1]
    %vm43 = vcmask 64512
    %v44 = vsel %vm43, %v41, 0.0
    %45 = vadd.xlane.f32.xlu0 %v44
    %v46 = vpop.xlane.xlu0 %45
    %v47 = vrot.slane %v46, 4
    %v48 = vadd.f32 %v46, %v47
    %v49 = vrot.slane %v48, 2
    %v50 = vadd.f32 %v48, %v49
    %v51 = vrot.slane %v50, 1
    %v52 = vadd.f32 %v50, %v51
    %s53 = vtos %v52
    %v54 = vstv %s53
    %v55 = vadd.f32 %v42, %v54
    %vm56 = vcmask 0
    %57 = vst.msk [vmem:[#allocation2] sm:$0x1] %vm56, %v55
    // Predicated region
    $region18: #{tpu_custom_call.1} parent=1 // pred_check
      %p58 = pneg %p15
    $region19: #{tpu_custom_call.1} parent=1 // pred_check_branch
      %60 = sbr.rel (%p58) target = $region21
    $region20: #{tpu_custom_call.1} parent=1 // pred_region
      %v61 = vld [vmem:[#allocation2] sm:$0x1]
      %v62 = vmul.f32 %v23, 0.0
      %v63 = vadd.f32 %v62, 1.0
      %v64 = vmax.f32 %v63, 0.0
      %vm65 = vcmask 57344
      %v66 = vsel %vm65, %v64, 0.0
      %67 = vadd.xlane.f32.xlu0 %v66
      %v68 = vpop.xlane.xlu0 %67
      %v69 = vrot.slane %v68, 4
      %v70 = vadd.f32 %v68, %v69
      %v71 = vrot.slane %v70, 2
      %v72 = vadd.f32 %v70, %v71
      %v73 = vrot.slane %v72, 1
      %v74 = vadd.f32 %v72, %v73
      %s75 = vtos %v74
      %s76 = sadd.f32 %s75, 8.0
      %v77 = vstv %s76
      %v78 = vsub.f32 %v61, %v77
      %v79 = vmul.f32 %v78, 0.008928572
      %80 = vst.msk [vmem:[#allocation2] sm:$0x1] %vm56, %v79
    $region21: #{tpu_custom_call.1} parent=1 // pred_fallthru
      _
    // Predicated region
    $region22: #{tpu_custom_call.1} parent=1 // pred_check
      _
    $region23: #{tpu_custom_call.1} parent=1 // pred_check_branch
      %82 = sbr.rel (0) target = $region25
    $region24: #{tpu_custom_call.1} parent=1 // pred_region
      %s84 = ssub.s32 16, 16
      %85 = vsyncadd [#allocation3], %s84
      %s87 = sshll.u32 [#allocation2], 4
      %s88 = int_to_ptr.vmem [resolvable:$true] %s87
      %90 = dma.vmem_to_hbm [thread:$0]  %s88, 16, %s3, [#allocation3]
    $region25: #{tpu_custom_call.1} parent=1 // pred_fallthru
      _
    // Predicated region
    $region26: #{tpu_custom_call.1} parent=1 // pred_check
      _
    $region27: #{tpu_custom_call.1} parent=1 // pred_check_branch
      %92 = sbr.rel (0) target = $region29
    $region28: #{tpu_custom_call.1} parent=1 // pred_region
      %93 = dma.done [#allocation3], 16
    $region29: #{tpu_custom_call.1} parent=1 // pred_fallthru
      _
    %94 = vsyncpa [#allocation3], 1

</llo_original>
